<compile_context>
chip_gen: v6e
topology: v6e:2x2x1
jax: 0.10.0
libtpu: 0.0.40
codegen_flags: <defaults>
</compile_context>

<pallas_src>
import jax
import jax.numpy as jnp
from jax.experimental import pallas as pl
from jax.experimental.pallas import tpu as pltpu

_LANE = 128
_SUBLANE = 8


def _round_up(x, m):
    return ((x + m - 1) // m) * m


def _tpu_vmem_capacity_bytes():
    try:
        info = pltpu.get_tpu_info()
        for attr in ("vmem_capacity_bytes", "vmem_bytes", "vmem_size_bytes"):
            v = getattr(info, attr, None)
            if v:
                return int(v)
    except Exception:
        pass
    return 64 * 1024 * 1024  # conservative default (v7x-sized)


def _vmem_budgets():
    cap = _tpu_vmem_capacity_bytes()
    if cap >= 96 * 1024 * 1024:                 # 128-MiB parts: v5e / v6e class
        return 64 * 1024 * 1024, 96 * 1024 * 1024
    return 28 * 1024 * 1024, 48 * 1024 * 1024   # 64-MiB parts: v7x class


def _is_multi_tensorcore_chip():
    # v7x has 2 TensorCores per chip; v5e/v6e have 1.  Best-effort detection.
    try:
        kind = jax.devices()[0].device_kind.lower()
    except Exception:
        return False
    return "7" in kind


def _choose_batch_tile(B, L1, F, in_itemsize, out_itemsize, budget, multi_core):
    # Exact lane-padded VMEM footprint per batch row (blocks are dense: no sublane pad).
    x2_row = _round_up(L1 * F, _LANE) * in_itemsize       # streamed input block
    out_row = _round_up(F, _LANE) * out_itemsize          # output block
    g_row = _round_up(L1, _LANE) * 4                      # gate block (f32)
    tmp_row = 4 * _round_up(F, _LANE) * 4                 # in-kernel f32 temporaries
    per_row = 2 * (x2_row + out_row + g_row) + tmp_row    # x2/out/g double-buffered
    bt = max(1, budget // per_row)
    bt = min(bt, B)
    if multi_core and B >= 2 * _SUBLANE:
        # v7x: at least 2 grid steps so the second TensorCore is not idle.
        bt = min(bt, _round_up(-(-B // 2), _SUBLANE))
    if bt >= B:
        return B                                          # single full-extent block
    if bt < _SUBLANE:
        return min(B, _SUBLANE)                           # smallest legal aligned tile
    bt = (bt // _SUBLANE) * _SUBLANE
    if multi_core:
        # Prefer an even grid-step count so both cores get equal work.
        cand = bt
        while cand > _SUBLANE and (-(-B // cand)) % 2 == 1:
            cand -= _SUBLANE
        if (-(-B // cand)) % 2 == 0:
            bt = cand
    return bt


def _gated_fusion_kernel(g_ref, x2_ref, o_ref):
    # g_ref:  (bt, L1)   f32 gate, already pre-scaled by 1/L1
    # x2_ref: (bt, L1*F) input dtype, per-row layout [l=0 | l=1 | ... | l=L1-1]
    # o_ref:  (bt, F)    output, written once
    F = o_ref.shape[-1]
    L1 = g_ref.shape[-1]
    acc = x2_ref[:, 0:F].astype(jnp.float32) * g_ref[:, 0:1]
    for l in range(1, L1):                                # short static unroll over L1
        acc = acc + x2_ref[:, l * F:(l + 1) * F].astype(jnp.float32) * g_ref[:, l:l + 1]
    o_ref[...] = acc.astype(o_ref.dtype)


def gated_fusion_forward(input1, input2, w1, w2, *, block_rows=None):
    """input1: (B, Cin, N, T) with T == 1, Cin = skip_channels*(layer_num+1).
    input2: (B, L1, skip_channels, N, T) with L1 = layer_num+1.
    w1: (H, Cin), w2: (L1, H)  (torch nn.Linear (out, in), bias=False).
    Returns (B, skip_channels, N, T), matching the PyTorch forward for B > 1, T == 1."""
    B, Cin, N, T = input1.shape
    B2, L1, C, N2, T2 = input2.shape
    assert B2 == B and N2 == N and T2 == T
    assert T == 1, "gated_fusion is used with a single time step after the skip convs"
    assert B > 1, "torch.squeeze(se) would also drop the batch dim for B == 1"
    H = w1.shape[0]
    assert w1.shape == (H, Cin) and w2.shape == (L1, H)

    # --- squeeze-excite gate, hoisted out of the hot kernel (tiny; plain XLA, f32) ---
    se = jnp.mean(input1.astype(jnp.float32), axis=2)[:, :, 0]      # (B, Cin)
    h = jax.nn.relu(se @ w1.astype(jnp.float32).T)                  # (B, H)
    g = jax.nn.sigmoid(h @ w2.astype(jnp.float32).T)                # (B, L1)
    g = g * (1.0 / L1)                                              # fold mean over L1

    # --- view input2 as a contiguous (B, L1*F) slab (free reshape); reduce in-kernel ---
    F = C * N * T
    x2 = input2.reshape(B, L1 * F)           # original dtype; cast happens in-kernel
    out_dtype = input2.dtype
    in_isz = jnp.dtype(x2.dtype).itemsize
    out_isz = jnp.dtype(out_dtype).itemsize

    budget, vmem_limit = _vmem_budgets()
    multi_core = _is_multi_tensorcore_chip()
    bt = _choose_batch_tile(B, L1, F, in_isz, out_isz, budget, multi_core)
    if block_rows is not None:               # test hook: force a specific batch tile
        bt = B if block_rows >= B else max(_SUBLANE, (block_rows // _SUBLANE) * _SUBLANE)

    grid = (pl.cdiv(B, bt),)                 # last block may be partial: no x2 pad/copy
    cost = pl.CostEstimate(
        flops=2 * B * L1 * F,
        transcendentals=0,
        bytes_accessed=B * L1 * F * in_isz + B * F * out_isz + B * L1 * 4,
    )

    out = pl.pallas_call(
        _gated_fusion_kernel,
        out_shape=jax.ShapeDtypeStruct((B, F), out_dtype),
        grid=grid,
        in_specs=[
            pl.BlockSpec((bt, L1), lambda i: (i, 0)),         # per-row gate (tiny)
            pl.BlockSpec((bt, L1 * F), lambda i: (i, 0)),     # dense contiguous stream
        ],
        out_specs=pl.BlockSpec((bt, F), lambda i: (i, 0)),    # single store per block
        compiler_params=pltpu.CompilerParams(
            dimension_semantics=("parallel",),
            vmem_limit_bytes=vmem_limit,
        ),
        cost_estimate=cost,
    )(g.astype(jnp.float32), x2)

    return out.reshape(B, C, N, T)


def gated_fusion_ref(input1, input2, w1, w2):
    # pure-JAX reference mirroring the PyTorch forward exactly (B > 1, T == 1)
    se = jnp.mean(input1, axis=2)                 # (B, Cin, T)
    se = jnp.squeeze(se)                          # (B, Cin)
    se = jax.nn.relu(se @ w1.T)                   # dense1
    se = jax.nn.sigmoid(se @ w2.T)                # dense2
    se = se[:, :, None, None, None]               # 3x unsqueeze(-1)
    x = input2 * se
    return jnp.mean(x, axis=1)                    # (B, C, N, T)


def _run_case(key, B, skip_channels, layer_num, N, T, ratio=1, block_rows=None):
    L1 = layer_num + 1
    Cin = skip_channels * L1
    H = L1 * ratio
    k1, k2, k3, k4 = jax.random.split(key, 4)
    input1 = jax.random.normal(k1, (B, Cin, N, T), dtype=jnp.float32)
    input2 = jax.random.normal(k2, (B, L1, skip_channels, N, T), dtype=jnp.float32)
    # deterministic nn.Linear-style init: U(-1/sqrt(fan_in), 1/sqrt(fan_in)), bias=False
    w1 = jax.random.uniform(k3, (H, Cin), jnp.float32, -1.0, 1.0) / jnp.sqrt(Cin)
    w2 = jax.random.uniform(k4, (L1, H), jnp.float32, -1.0, 1.0) / jnp.sqrt(H)

    out = gated_fusion_forward(input1, input2, w1, w2, block_rows=block_rows)
    out = jax.block_until_ready(out)
    ref = gated_fusion_ref(input1, input2, w1, w2)
    assert out.shape == ref.shape == (B, skip_channels, N, T)
    assert jnp.allclose(out, ref, atol=1e-5, rtol=1e-5), "mismatch vs reference"


if __name__ == "__main__":
    key = jax.random.PRNGKey(0)
    k_a, k_b = jax.random.split(key)

    # Case 1: small demo shape (single full block).
    _run_case(k_a, B=2, skip_channels=4, layer_num=3, N=8, T=1)

    # Case 2: forced small batch tile -> multi-step grid with a partial last block
    # (exercises the no-pad boundary handling).
    _run_case(k_b, B=20, skip_channels=4, layer_num=3, N=16, T=1, block_rows=8)

    print("KERNEL_OK")
</pallas_src>

<mosaic_0001>
module attributes {stable_mosaic.version = 11 : i64} {
  func.func @_gated_fusion_kernel(%arg0: i32, %arg1: memref<2x4xf32, #tpu.memory_space<vmem>>, %arg2: memref<2x128xf32, #tpu.memory_space<vmem>>, %arg3: memref<2x32xf32, #tpu.memory_space<vmem>>) attributes {dimension_semantics = [#tpu.dimension_semantics<parallel>], iteration_bounds = array<i64: 1>, scalar_prefetch = 0 : i64, scratch_operands = 0 : i64, tpu.core_type = #tpu.core_type<tc>, window_params = [{transform_indices = @transform_0, window_bounds = array<i64: 2, 4>}, {transform_indices = @transform_1, window_bounds = array<i64: 2, 128>}, {transform_indices = @transform_2, window_bounds = array<i64: 2, 32>}]} {
    %c0 = arith.constant 0 : index
    %c0_0 = arith.constant 0 : index
    %0 = vector.load %arg2[%c0, %c0_0] : memref<2x128xf32, #tpu.memory_space<vmem>>, vector<2x32xf32>
    %c0_1 = arith.constant 0 : index
    %c0_2 = arith.constant 0 : index
    %1 = vector.load %arg1[%c0_1, %c0_2] : memref<2x4xf32, #tpu.memory_space<vmem>>, vector<2x1xf32>
    %2 = vector.broadcast %1 : vector<2x1xf32> to vector<2x32xf32>
    %3 = arith.mulf %0, %2 : vector<2x32xf32>
    %c0_3 = arith.constant 0 : index
    %c32 = arith.constant 32 : index
    %4 = vector.load %arg2[%c0_3, %c32] : memref<2x128xf32, #tpu.memory_space<vmem>>, vector<2x32xf32>
    %c0_4 = arith.constant 0 : index
    %c1 = arith.constant 1 : index
    %5 = vector.load %arg1[%c0_4, %c1] : memref<2x4xf32, #tpu.memory_space<vmem>>, vector<2x1xf32>
    %6 = vector.broadcast %5 : vector<2x1xf32> to vector<2x32xf32>
    %7 = arith.mulf %4, %6 : vector<2x32xf32>
    %8 = arith.addf %3, %7 : vector<2x32xf32>
    %c0_5 = arith.constant 0 : index
    %c64 = arith.constant 64 : index
    %9 = vector.load %arg2[%c0_5, %c64] : memref<2x128xf32, #tpu.memory_space<vmem>>, vector<2x32xf32>
    %c0_6 = arith.constant 0 : index
    %c2 = arith.constant 2 : index
    %10 = vector.load %arg1[%c0_6, %c2] : memref<2x4xf32, #tpu.memory_space<vmem>>, vector<2x1xf32>
    %11 = vector.broadcast %10 : vector<2x1xf32> to vector<2x32xf32>
    %12 = arith.mulf %9, %11 : vector<2x32xf32>
    %13 = arith.addf %8, %12 : vector<2x32xf32>
    %c0_7 = arith.constant 0 : index
    %c96 = arith.constant 96 : index
    %14 = vector.load %arg2[%c0_7, %c96] : memref<2x128xf32, #tpu.memory_space<vmem>>, vector<2x32xf32>
    %c0_8 = arith.constant 0 : index
    %c3 = arith.constant 3 : index
    %15 = vector.load %arg1[%c0_8, %c3] : memref<2x4xf32, #tpu.memory_space<vmem>>, vector<2x1xf32>
    %16 = vector.broadcast %15 : vector<2x1xf32> to vector<2x32xf32>
    %17 = arith.mulf %14, %16 : vector<2x32xf32>
    %18 = arith.addf %13, %17 : vector<2x32xf32>
    %c0_9 = arith.constant 0 : index
    %c0_10 = arith.constant 0 : index
    %19 = vector.load %arg3[%c0_9, %c0_10] : memref<2x32xf32, #tpu.memory_space<vmem>>, vector<2x32xf32>
    tpu.vector_store %arg3[%c0_9, %c0_10], %18 {strides = array<i32>} : memref<2x32xf32, #tpu.memory_space<vmem>>, vector<2x32xf32>,
    return
  }
  func.func @transform_0(%arg0: i32) -> (i32, i32) {
    %c0_i32 = arith.constant 0 : i32
    %c0_i32_0 = arith.constant 0 : i32
    return %arg0, %c0_i32 : i32, i32
  }
  func.func @transform_1(%arg0: i32) -> (i32, i32) {
    %c0_i32 = arith.constant 0 : i32
    %c0_i32_0 = arith.constant 0 : i32
    return %arg0, %c0_i32 : i32, i32
  }
  func.func @transform_2(%arg0: i32) -> (i32, i32) {
    %c0_i32 = arith.constant 0 : i32
    %c0_i32_0 = arith.constant 0 : i32
    return %arg0, %c0_i32 : i32, i32
  }
}

</mosaic_0001>

<llo_original>
// kernel: tpu_custom_call.1
$region0: #{tpu_custom_call.1}
  #allocation0 [shape = 'u32[]', space=smem, size = 0x4, offset = 0x4, fixed_abs, tag = 'smem constant byte address 0x4 - core index']
  #allocation1 [shape = 'u32[144,128]{1,0:T(1,128)}', space=vmem, size = 0x12000, scoped, tag = 'internal scratch']
  %s0 = inlined_call_operand.hbm [shape: f32[2,4], index: 0, kind: input, shape index: {}]
  %s1 = inlined_call_operand.hbm [shape: f32[2,128], index: 1, kind: input, shape index: {}]
  %s2 = inlined_call_operand.hbm [shape: f32[2,32], index: 2, kind: output, shape index: {}]
  %s3 = sld [smem:[#allocation0]]
  $region26: #{tpu_custom_call.1} parent=0
    _
  %s5 = ssub.s32 1, %s3
  %s6 = scalar_select 0, %s5, %s3
  $region1: #{tpu_custom_call.1} parent=0
    #allocation2 [shape = 'u8[1024]{0}', space=vmem, size = 0x400, scoped, tag = 'input window, operand 0, single buffered']
    #allocation3 [shape = 's32[1]{0}', space=sflag, size = 0x4, scoped, tag = 'scoped memory for tpu_custom_call.1']
    #allocation4 [shape = 's32[1]{0}', space=sflag, size = 0x4, scoped, tag = 'scoped memory for tpu_custom_call.1']
    #allocation5 [shape = 'u8[1024]{0}', space=vmem, size = 0x400, scoped, tag = 'input window, operand 1, single buffered']
    #allocation6 [shape = 's32[1]{0}', space=sflag, size = 0x4, scoped, tag = 'scoped memory for tpu_custom_call.1']
    #allocation7 [shape = 'u8[1024]{0}', space=vmem, size = 0x400, scoped, tag = 'output window, operand 0, single buffered']
    %7 = vsyncpa [#allocation3], 0
    %8 = vsyncpa [#allocation6], 0
    %9 = vsyncpa [#allocation4], 0
    // Predicated region
    $region2: #{tpu_custom_call.1} parent=1 // pred_check
      _
    $region3: #{tpu_custom_call.1} parent=1 // pred_check_branch
      %11 = sbr.rel (0) target = $region5
    $region4: #{tpu_custom_call.1} parent=1 // pred_region
      %s13 = ssub.s32 32, 32
      %14 = vsyncadd [#allocation3], %s13
      %s16 = sshll.u32 [#allocation2], 4
      %s17 = int_to_ptr.vmem [resolvable:$true] %s16
      %19 = dma.hbm_to_vmem [thread:$0]  %s0, 32, %s17, [#allocation3]
    $region5: #{tpu_custom_call.1} parent=1 // pred_fallthru
      _
    // Predicated region
    $region6: #{tpu_custom_call.1} parent=1 // pred_check
      _
    $region7: #{tpu_custom_call.1} parent=1 // pred_check_branch
      %21 = sbr.rel (0) target = $region9
    $region8: #{tpu_custom_call.1} parent=1 // pred_region
      %s23 = ssub.s32 32, 32
      %24 = vsyncadd [#allocation6], %s23
      %s26 = sshll.u32 [#allocation5], 4
      %s27 = int_to_ptr.vmem [resolvable:$true] %s26
      %29 = dma.hbm_to_vmem [thread:$0]  %s1, 32, %s27, [#allocation6]
    $region9: #{tpu_custom_call.1} parent=1 // pred_fallthru
      _
    // Predicated region
    $region10: #{tpu_custom_call.1} parent=1 // pred_check
      _
    $region11: #{tpu_custom_call.1} parent=1 // pred_check_branch
      %31 = sbr.rel (0) target = $region13
    $region12: #{tpu_custom_call.1} parent=1 // pred_region
      %32 = dma.done [#allocation3], 32
    $region13: #{tpu_custom_call.1} parent=1 // pred_fallthru
      _
    // Predicated region
    $region14: #{tpu_custom_call.1} parent=1 // pred_check
      _
    $region15: #{tpu_custom_call.1} parent=1 // pred_check_branch
      %34 = sbr.rel (0) target = $region17
    $region16: #{tpu_custom_call.1} parent=1 // pred_region
      %35 = dma.done [#allocation6], 32
    $region17: #{tpu_custom_call.1} parent=1 // pred_fallthru
      _
    %v36 = vld [vmem:[#allocation5] sm:$0x3]
    %v37 = vld [vmem:[#allocation2] sm:$0x3]
    %39 = vset.pattern.permute.xlu0 0
    %40 = vperm.xlu0 %39, %v37
    %v41 = vpop.permute.xlu0 %40
    %v43 = vmul.f32 %v36, %v41
    %44 = vset.pattern.permute.xlu0 1
    %45 = vperm.xlu0 %44, %v37
    %v46 = vpop.permute.xlu0 %45
    %v48 = vmul.f32 %v36, %v46
    %50 = vrot.lane.b32.xlu0 %v48, 96
    %v51 = vpop.permute.xlu0 %50
    %v53 = vadd.f32 %v43, %v51
    %54 = vset.pattern.permute.xlu0 2
    %55 = vperm.xlu0 %54, %v37
    %v56 = vpop.permute.xlu0 %55
    %v58 = vmul.f32 %v36, %v56
    %60 = vrot.lane.b32.xlu0 %v58, 64
    %v61 = vpop.permute.xlu0 %60
    %v63 = vadd.f32 %v53, %v61
    %64 = vset.pattern.permute.xlu0 3
    %65 = vperm.xlu0 %64, %v37
    %v66 = vpop.permute.xlu0 %65
    %v68 = vmul.f32 %v36, %v66
    %70 = vrot.lane.b32.xlu0 %v68, 32
    %v71 = vpop.permute.xlu0 %70
    %v73 = vadd.f32 %v63, %v71
    %vm74 = vcmask 254976
    %75 = vst.msk [vmem:[#allocation7] sm:$0x3] %vm74, %v73
    // Predicated region
    $region18: #{tpu_custom_call.1} parent=1 // pred_check
      _
    $region19: #{tpu_custom_call.1} parent=1 // pred_check_branch
      %77 = sbr.rel (0) target = $region21
    $region20: #{tpu_custom_call.1} parent=1 // pred_region
      %s79 = ssub.s32 32, 32
      %80 = vsyncadd [#allocation4], %s79
      %s82 = sshll.u32 [#allocation7], 4
      %s83 = int_to_ptr.vmem [resolvable:$true] %s82
      %85 = dma.vmem_to_hbm [thread:$0]  %s83, 32, %s2, [#allocation4]
    $region21: #{tpu_custom_call.1} parent=1 // pred_fallthru
      _
    // Predicated region
    $region22: #{tpu_custom_call.1} parent=1 // pred_check
      _
    $region23: #{tpu_custom_call.1} parent=1 // pred_check_branch
      %87 = sbr.rel (0) target = $region25
    $region24: #{tpu_custom_call.1} parent=1 // pred_region
      %88 = dma.done [#allocation4], 32
    $region25: #{tpu_custom_call.1} parent=1 // pred_fallthru
      _
    %89 = vsyncpa [#allocation3], 1
    %90 = vsyncpa [#allocation6], 1
    %91 = vsyncpa [#allocation4], 1

</llo_original>
